<compile_context>
chip_gen: v7x
topology: tpu7x:2x2x1
jax: 0.10.0
libtpu: 0.0.40
codegen_flags: <defaults>
</compile_context>

<pallas_src>
import functools

import jax
import jax.numpy as jnp
from jax.experimental import pallas as pl
from jax.experimental.pallas import tpu as pltpu

_NEG_SLOPE = 0.01  # torch.nn.LeakyReLU default


def _leaky_relu(x):
    return jnp.where(x >= 0, x, _NEG_SLOPE * x)


def _round_up(x, m=8):
    return (x + m - 1) // m * m


def _qnet_kernel(state_ref, action_ref, wp_ref, w3t_ref, y_ref, *,
                 d_state, d_action, n_hidden,
                 r_w1a, r_b1, r_b2, r_b3, r_w2):
    """Fused 3-layer twin-Q MLP (both ensemble members lane-packed, width 2H).

    state:  (B, d_state)            action: (B, d_action)
    wp:     (R, 2H)  packed params at 8-aligned row offsets:
              [0:d_state]             w1 state half (members packed on lanes)
              [r_w1a:r_w1a+d_action]  w1 action half
              [r_b1]                  b1  (1, 2H)
              [r_b2]                  b2  (1, 2H)
              [r_b3, 0:2]             b3  (zero-padded row)
              [r_w2:r_w2+2H]          w2  (2H, 2H) block-diagonal
    w3t:    (2H, 2)  pre-transposed layer-3 weights; member e occupies rows
                     [e*H:(e+1)*H] of column e, zeros elsewhere.
    y:      (B, 2)   column e = Q_e(state, action)
    """
    H2 = 2 * n_hidden
    s = state_ref[...]
    a = action_ref[...]

    # Layer 1: the torch concat is folded into a state-half + action-half matmul pair.
    h1 = (jnp.dot(s, wp_ref[0:d_state, :], preferred_element_type=jnp.float32)
          + jnp.dot(a, wp_ref[r_w1a:r_w1a + d_action, :],
                    preferred_element_type=jnp.float32)
          + wp_ref[r_b1:r_b1 + 1, :])
    h1 = _leaky_relu(h1)

    # Layer 2: block-diagonal weights keep the two members independent.
    # TODO(synk): at large n_hidden (2H > 256) split this back into two (H, H)
    # dots so the MXU does not multiply the zero blocks (matters first on v7x).
    h2 = (jnp.dot(h1, wp_ref[r_w2:r_w2 + H2, :],
                  preferred_element_type=jnp.float32)
          + wp_ref[r_b2:r_b2 + 1, :])
    h2 = _leaky_relu(h2)

    # Layer 3: one MXU matmul (B,2H)x(2H,2); masked columns keep members separate.
    y = (jnp.dot(h2, w3t_ref[...], preferred_element_type=jnp.float32)
         + wp_ref[r_b3:r_b3 + 1, 0:2])
    y_ref[...] = y


def pack_params(params, d_state):
    """One-time repack of torch-layout params into the fused, coalesced layout.

    NOTE: forward/inference layout only -- if gradients ever flow through the
    packed arrays, the zero blocks (block-diag w2, masked w3T) must be
    re-masked after each update.
    """
    w1, b1, w2, b2, w3, b3 = params  # (2,Din,H) (2,1,H) (2,H,H) (2,1,H) (2,H,1) (2,1,1)
    H = w1.shape[-1]
    d_in = w1.shape[1]
    d_action = d_in - d_state
    H2 = 2 * H

    r_w1a = _round_up(d_state)
    r_b1 = r_w1a + _round_up(d_action)
    r_b2 = r_b1 + 8
    r_b3 = r_b2 + 8
    r_w2 = r_b3 + 8
    rows = r_w2 + H2

    w1s = jnp.concatenate([w1[0, :d_state], w1[1, :d_state]], axis=1)   # (d_state, 2H)
    w1a = jnp.concatenate([w1[0, d_state:], w1[1, d_state:]], axis=1)   # (d_action, 2H)

    wp = jnp.zeros((rows, H2), jnp.float32)
    wp = wp.at[0:d_state].set(w1s)
    wp = wp.at[r_w1a:r_w1a + d_action].set(w1a)
    wp = wp.at[r_b1].set(jnp.concatenate([b1[0, 0], b1[1, 0]]))         # (2H,)
    wp = wp.at[r_b2].set(jnp.concatenate([b2[0, 0], b2[1, 0]]))         # (2H,)
    wp = wp.at[r_b3, 0:2].set(b3[:, 0, 0])                              # (2,)
    wp = wp.at[r_w2:r_w2 + H].set(jnp.pad(w2[0], ((0, 0), (0, H))))     # lanes [0:H]
    wp = wp.at[r_w2 + H:r_w2 + H2].set(jnp.pad(w2[1], ((0, 0), (H, 0))))  # lanes [H:2H]

    w3t = jnp.zeros((H2, 2), jnp.float32)                               # pre-transposed
    w3t = w3t.at[:H, 0].set(w3[0, :, 0])
    w3t = w3t.at[H:, 1].set(w3[1, :, 0])

    offsets = dict(r_w1a=r_w1a, r_b1=r_b1, r_b2=r_b2, r_b3=r_b3, r_w2=r_w2)
    return (wp, w3t), offsets


def make_action_value_forward(d_state, d_action, n_hidden, offsets):
    """Returns a jitted forward: (state, action, wp, w3t) -> (y1 (B,1), y2 (B,1))."""
    kernel = functools.partial(_qnet_kernel, d_state=d_state, d_action=d_action,
                               n_hidden=n_hidden, **offsets)
    vmem = pl.BlockSpec(memory_space=pltpu.MemorySpace.VMEM)

    # TODO(synk): at this size the call is launch/DMA-latency bound; the real
    # remaining lever is fusing more of the SAC step (target Q, min(Q1,Q2), ...)
    # into one kernel so the per-call weight DMAs are amortized.  Splitting the
    # batch over the second v7x TensorCore only pays off at B >= ~1024.
    @jax.jit
    def fwd(state, action, wp, w3t):
        B = state.shape[0]
        y = pl.pallas_call(
            kernel,
            out_shape=jax.ShapeDtypeStruct((B, 2), jnp.float32),
            in_specs=[vmem, vmem, vmem, vmem],
            out_specs=vmem,
        )(state, action, wp, w3t)
        return y[:, 0:1], y[:, 1:2]

    return fwd


def _orthogonal(key, n_in, n_out):
    # Deterministic orthogonal init (same semantics as nn.init.orthogonal_).
    a = jax.random.normal(key, (max(n_in, n_out), min(n_in, n_out)), jnp.float32)
    q, r = jnp.linalg.qr(a)
    q = q * jnp.sign(jnp.diagonal(r))[None, :]
    if n_in < n_out:
        q = q.T
    return q[:n_in, :n_out].astype(jnp.float32)


def init_params(key, d_state, d_action, n_hidden, ensemble_size=2):
    d_in = d_state + d_action
    keys = jax.random.split(key, 3 * ensemble_size)

    def stack_layer(koff, n_in, n_out):
        ws = [_orthogonal(keys[koff + e], n_in, n_out) for e in range(ensemble_size)]
        w = jnp.stack(ws)                                   # (E, n_in, n_out)
        b = jnp.zeros((ensemble_size, 1, n_out), jnp.float32)
        return w, b

    w1, b1 = stack_layer(0, d_in, n_hidden)
    w2, b2 = stack_layer(ensemble_size, n_hidden, n_hidden)
    w3, b3 = stack_layer(2 * ensemble_size, n_hidden, 1)
    return (w1, b1, w2, b2, w3, b3)


if __name__ == "__main__":
    d_state, d_action, n_hidden, batch = 12, 4, 32, 8

    key = jax.random.PRNGKey(0)
    k_params, k_state, k_action = jax.random.split(key, 3)

    params = init_params(k_params, d_state, d_action, n_hidden)
    (wp, w3t), offsets = pack_params(params, d_state)         # one-time repack
    state = jax.random.normal(k_state, (batch, d_state), jnp.float32)
    action = jax.random.normal(k_action, (batch, d_action), jnp.float32)

    fwd = make_action_value_forward(d_state, d_action, n_hidden, offsets)
    y1, y2 = fwd(state, action, wp, w3t)
    jax.block_until_ready((y1, y2))

    # Reference in plain JAX (same math as the torch baddbmm path).
    w1, b1, w2, b2, w3, b3 = params
    x = jnp.concatenate([state, action], axis=1)
    x = jnp.broadcast_to(x[None], (2,) + x.shape)
    h = _leaky_relu(x @ w1 + b1)
    h = _leaky_relu(h @ w2 + b2)
    ref = h @ w3 + b3

    assert y1.shape == (batch, 1) and y2.shape == (batch, 1)
    assert jnp.allclose(y1, ref[0], atol=1e-3), float(jnp.max(jnp.abs(y1 - ref[0])))
    assert jnp.allclose(y2, ref[1], atol=1e-3), float(jnp.max(jnp.abs(y2 - ref[1])))

    print("KERNEL_OK")
</pallas_src>

<mosaic_0001>
module attributes {stable_mosaic.version = 11 : i64} {
  func.func @_qnet_kernel(%arg0: memref<8x12xf32, #tpu.memory_space<vmem>>, %arg1: memref<8x4xf32, #tpu.memory_space<vmem>>, %arg2: memref<112x64xf32, #tpu.memory_space<vmem>>, %arg3: memref<64x2xf32, #tpu.memory_space<vmem>>, %arg4: memref<8x2xf32, #tpu.memory_space<vmem>>) attributes {dimension_semantics = [], scalar_prefetch = 0 : i64, scratch_operands = 0 : i64, tpu.core_type = #tpu.core_type<tc>} {
    %c0 = arith.constant 0 : index
    %c0_0 = arith.constant 0 : index
    %0 = vector.load %arg0[%c0, %c0_0] : memref<8x12xf32, #tpu.memory_space<vmem>>, vector<8x12xf32>
    %c0_1 = arith.constant 0 : index
    %c0_2 = arith.constant 0 : index
    %1 = vector.load %arg1[%c0_1, %c0_2] : memref<8x4xf32, #tpu.memory_space<vmem>>, vector<8x4xf32>
    %c0_3 = arith.constant 0 : index
    %c0_4 = arith.constant 0 : index
    %2 = vector.load %arg2[%c0_3, %c0_4] : memref<112x64xf32, #tpu.memory_space<vmem>>, vector<12x64xf32>
    %cst = arith.constant dense<0.000000e+00> : vector<8x64xf32>
    %3 = tpu.matmul %0, %2, %cst {dimension_numbers = #tpu.dot_dimension_numbers<[1], [0], [0], [1], [0, 0, 1, 1], [], []>} : vector<8x12xf32>, vector<12x64xf32>, vector<8x64xf32> -> vector<8x64xf32>
    %c16 = arith.constant 16 : index
    %c0_5 = arith.constant 0 : index
    %4 = vector.load %arg2[%c16, %c0_5] : memref<112x64xf32, #tpu.memory_space<vmem>>, vector<4x64xf32>
    %cst_6 = arith.constant dense<0.000000e+00> : vector<8x64xf32>
    %5 = tpu.matmul %1, %4, %cst_6 {dimension_numbers = #tpu.dot_dimension_numbers<[1], [0], [0], [1], [0, 0, 1, 1], [], []>} : vector<8x4xf32>, vector<4x64xf32>, vector<8x64xf32> -> vector<8x64xf32>
    %6 = arith.addf %3, %5 : vector<8x64xf32>
    %c24 = arith.constant 24 : index
    %c0_7 = arith.constant 0 : index
    %7 = vector.load %arg2[%c24, %c0_7] : memref<112x64xf32, #tpu.memory_space<vmem>>, vector<1x64xf32>
    %8 = vector.broadcast %7 : vector<1x64xf32> to vector<8x64xf32>
    %9 = arith.addf %6, %8 : vector<8x64xf32>
    %cst_8 = arith.constant 0.000000e+00 : f32
    %10 = vector.broadcast %cst_8 : f32 to vector<8x64xf32>
    %11 = arith.cmpf oge, %9, %10 : vector<8x64xf32>
    %cst_9 = arith.constant 0.00999999977 : f32
    %12 = vector.broadcast %cst_9 : f32 to vector<8x64xf32>
    %13 = arith.mulf %12, %9 : vector<8x64xf32>
    %14 = arith.select %11, %9, %13 : vector<8x64xi1>, vector<8x64xf32>
    %c48 = arith.constant 48 : index
    %c0_10 = arith.constant 0 : index
    %15 = vector.load %arg2[%c48, %c0_10] : memref<112x64xf32, #tpu.memory_space<vmem>>, vector<64x64xf32>
    %cst_11 = arith.constant dense<0.000000e+00> : vector<8x64xf32>
    %16 = tpu.matmul %14, %15, %cst_11 {dimension_numbers = #tpu.dot_dimension_numbers<[1], [0], [0], [1], [0, 0, 1, 1], [], []>} : vector<8x64xf32>, vector<64x64xf32>, vector<8x64xf32> -> vector<8x64xf32>
    %c32 = arith.constant 32 : index
    %c0_12 = arith.constant 0 : index
    %17 = vector.load %arg2[%c32, %c0_12] : memref<112x64xf32, #tpu.memory_space<vmem>>, vector<1x64xf32>
    %18 = vector.broadcast %17 : vector<1x64xf32> to vector<8x64xf32>
    %19 = arith.addf %16, %18 : vector<8x64xf32>
    %cst_13 = arith.constant 0.000000e+00 : f32
    %20 = vector.broadcast %cst_13 : f32 to vector<8x64xf32>
    %21 = arith.cmpf oge, %19, %20 : vector<8x64xf32>
    %cst_14 = arith.constant 0.00999999977 : f32
    %22 = vector.broadcast %cst_14 : f32 to vector<8x64xf32>
    %23 = arith.mulf %22, %19 : vector<8x64xf32>
    %24 = arith.select %21, %19, %23 : vector<8x64xi1>, vector<8x64xf32>
    %c0_15 = arith.constant 0 : index
    %c0_16 = arith.constant 0 : index
    %25 = vector.load %arg3[%c0_15, %c0_16] : memref<64x2xf32, #tpu.memory_space<vmem>>, vector<64x2xf32>
    %cst_17 = arith.constant dense<0.000000e+00> : vector<8x2xf32>
    %26 = tpu.matmul %24, %25, %cst_17 {dimension_numbers = #tpu.dot_dimension_numbers<[1], [0], [0], [1], [0, 0, 1, 1], [], []>} : vector<8x64xf32>, vector<64x2xf32>, vector<8x2xf32> -> vector<8x2xf32>
    %c40 = arith.constant 40 : index
    %c0_18 = arith.constant 0 : index
    %27 = vector.load %arg2[%c40, %c0_18] : memref<112x64xf32, #tpu.memory_space<vmem>>, vector<1x2xf32>
    %28 = vector.broadcast %27 : vector<1x2xf32> to vector<8x2xf32>
    %29 = arith.addf %26, %28 : vector<8x2xf32>
    %c0_19 = arith.constant 0 : index
    %c0_20 = arith.constant 0 : index
    %30 = vector.load %arg4[%c0_19, %c0_20] : memref<8x2xf32, #tpu.memory_space<vmem>>, vector<8x2xf32>
    tpu.vector_store %arg4[%c0_19, %c0_20], %29 {strides = array<i32>} : memref<8x2xf32, #tpu.memory_space<vmem>>, vector<8x2xf32>,
    return
  }
}

</mosaic_0001>

<llo_original>
// kernel: fwd.1
$region0: #{fwd.1}
  #allocation0 [shape = 'u32[]', space=smem, size = 0x4, offset = 0x4, fixed_abs, tag = 'smem constant byte address 0x4 - core index']
  #allocation1 [shape = 'u32[144,128]{1,0:T(1,128)}', space=vmem, size = 0x12000, scoped, tag = 'internal scratch']
  %s0 = inlined_call_operand.vmem [shape: f32[8,12], index: 0, kind: input, shape index: {}]
  %s1 = inlined_call_operand.vmem [shape: f32[8,4], index: 1, kind: input, shape index: {}]
  %s2 = inlined_call_operand.vmem [shape: f32[112,64], index: 2, kind: input, shape index: {}]
  %s3 = inlined_call_operand.vmem [shape: f32[64,2], index: 3, kind: input, shape index: {}]
  %s4 = inlined_call_operand.vmem [shape: f32[8,2], index: 4, kind: output, shape index: {}]
  %s5 = sld [smem:[#allocation0]]
  $region26: #{fwd.1} parent=0
    _
  %s7 = ssub.s32 1, %s5
  %s8 = scalar_select 0, %s7, %s5
  // Predicated region
  $region2: #{fwd.1} parent=0 // pred_check
    _
  $region3: #{fwd.1} parent=0 // pred_check_branch
    %10 = sbr.rel (0) target = $region5
  $region4: #{fwd.1} parent=0 // pred_region
    _
  $region5: #{fwd.1} parent=0 // pred_fallthru
    _
  // Predicated region
  $region6: #{fwd.1} parent=0 // pred_check
    _
  $region7: #{fwd.1} parent=0 // pred_check_branch
    %12 = sbr.rel (0) target = $region9
  $region8: #{fwd.1} parent=0 // pred_region
    _
  $region9: #{fwd.1} parent=0 // pred_fallthru
    _
  // Predicated region
  $region10: #{fwd.1} parent=0 // pred_check
    _
  $region11: #{fwd.1} parent=0 // pred_check_branch
    %14 = sbr.rel (0) target = $region13
  $region12: #{fwd.1} parent=0 // pred_region
    _
  $region13: #{fwd.1} parent=0 // pred_fallthru
    _
  // Predicated region
  $region14: #{fwd.1} parent=0 // pred_check
    _
  $region15: #{fwd.1} parent=0 // pred_check_branch
    %16 = sbr.rel (0) target = $region17
  $region16: #{fwd.1} parent=0 // pred_region
    _
  $region17: #{fwd.1} parent=0 // pred_fallthru
    _
  %v17 = vld [vmem:[%s0] sm:$0xff]
  %v18 = vld [vmem:[%s1] sm:$0xff]
  %v19 = vld [vmem:[%s2] sm:$0xff]
  %v20 = vld [vmem:[%s2 + $0x8] sm:$0xf]
  %v21 = vld [vmem:[%s2 + $0x10] sm:$0xf]
  %vm22 = vcmask 31744
  %v24 = vsel %vm22, %v18, 0
  %vm26 = vcmask 1043456
  %v28 = vsel %vm26, %v21, 0
  %30 = vmatprep.subr.mxu0 0.0
  %31 = vmatpush1.msra.mxu0 %v28
  %32 = vmatprep.subr.mxu0 0.0
  %33 = vmatpush1.msra.mxu0 0.0
  %34 = vmatprep.subr.mxu0 0.0
  %35 = vmatpush1.msra.mxu0 0.0
  %36 = vmatprep.subr.mxu0 0.0
  %37 = vmatpush1.msra.mxu0 0.0
  %38 = vmatprep.subr.mxu0 0.0
  %39 = vmatpush1.msra.mxu0 0.0
  %40 = vmatprep.subr.mxu0 0.0
  %41 = vmatpush1.msra.mxu0 0.0
  %42 = vmatprep.subr.mxu0 0.0
  %43 = vmatpush1.msra.mxu0 0.0
  %44 = vmatprep.subr.mxu0 0.0
  %45 = vmatpush1.msra.mxu0 0.0
  %46 = vmatprep.subr.mxu0 0.0
  %47 = vmatpush1.msra.mxu0 0.0
  %48 = vmatprep.subr.mxu0 0.0
  %49 = vmatpush1.msra.mxu0 0.0
  %50 = vmatprep.subr.mxu0 0.0
  %51 = vmatpush1.msra.mxu0 0.0
  %52 = vmatprep.subr.mxu0 0.0
  %53 = vmatpush1.msra.mxu0 0.0
  %54 = vmatprep.subr.mxu0 0.0
  %55 = vmatpush1.msra.mxu0 0.0
  %56 = vmatprep.subr.mxu0 0.0
  %57 = vmatpush1.msra.mxu0 0.0
  %58 = vmatprep.subr.mxu0 0.0
  %59 = vmatpush1.msra.mxu0 0.0
  %60 = vmatprep.subr.mxu0 0.0
  %61 = vmatpush1.msra.mxu0 0.0
  %62 = vmatprep.subr.mxu0 0.0
  %63 = vmatpush1.msra.mxu0 0.0
  %64 = vmatprep.subr.mxu0 0.0
  %65 = vmatpush1.msra.mxu0 0.0
  %66 = vmatprep.subr.mxu0 0.0
  %67 = vmatpush1.msra.mxu0 0.0
  %68 = vmatprep.subr.mxu0 0.0
  %69 = vmatpush1.msra.mxu0 0.0
  %70 = vmatprep.subr.mxu0 0.0
  %71 = vmatpush1.msra.mxu0 0.0
  %72 = vmatprep.subr.mxu0 0.0
  %73 = vmatpush1.msra.mxu0 0.0
  %74 = vmatprep.subr.mxu0 0.0
  %75 = vmatpush1.msra.mxu0 0.0
  %76 = vmatprep.subr.mxu0 0.0
  %77 = vmatpush1.msra.mxu0 0.0
  %78 = vmatprep.subr.mxu0 0.0
  %79 = vmatpush1.msra.mxu0 0.0
  %80 = vmatprep.subr.mxu0 0.0
  %81 = vmatpush1.msra.mxu0 0.0
  %82 = vmatprep.subr.mxu0 0.0
  %83 = vmatpush1.msra.mxu0 0.0
  %84 = vmatprep.subr.mxu0 0.0
  %85 = vmatpush1.msra.mxu0 0.0
  %86 = vmatprep.subr.mxu0 0.0
  %87 = vmatpush1.msra.mxu0 0.0
  %88 = vmatprep.subr.mxu0 0.0
  %89 = vmatpush1.msra.mxu0 0.0
  %90 = vmatprep.subr.mxu0 0.0
  %91 = vmatpush1.msra.mxu0 0.0
  %92 = vmatprep.subr.mxu0 0.0
  %93 = vmatpush1.msra.mxu0 0.0
  %94 = vmatprep.mubr.f32.mxu0 0.0
  %95 = vmatmul.mubr.f32.gmra.mrb[0].mxu0 %v24
  %v96 = vpop.f32.mrb[0].mxu0
  %v97 = vadd.f32 0.0, %v96
  %v98 = vpop.f32.mrb[0].mxu0
  %99 = vdwg.mxu0
  %vm100 = vcmask 97280
  %v102 = vsel %vm100, %v17, 0
  %v105 = vsel %vm26, %v20, 0
  %107 = vmatprep.subr.mxu0 0.0
  %108 = vmatpush1.msra.mxu0 %v19
  %109 = vmatprep.subr.mxu0 0.0
  %110 = vmatpush1.msra.mxu0 %v105
  %111 = vmatprep.subr.mxu0 0.0
  %112 = vmatpush1.msra.mxu0 0.0
  %113 = vmatprep.subr.mxu0 0.0
  %114 = vmatpush1.msra.mxu0 0.0
  %115 = vmatprep.subr.mxu0 0.0
  %116 = vmatpush1.msra.mxu0 0.0
  %117 = vmatprep.subr.mxu0 0.0
  %118 = vmatpush1.msra.mxu0 0.0
  %119 = vmatprep.subr.mxu0 0.0
  %120 = vmatpush1.msra.mxu0 0.0
  %121 = vmatprep.subr.mxu0 0.0
  %122 = vmatpush1.msra.mxu0 0.0
  %123 = vmatprep.subr.mxu0 0.0
  %124 = vmatpush1.msra.mxu0 0.0
  %125 = vmatprep.subr.mxu0 0.0
  %126 = vmatpush1.msra.mxu0 0.0
  %127 = vmatprep.subr.mxu0 0.0
  %128 = vmatpush1.msra.mxu0 0.0
  %129 = vmatprep.subr.mxu0 0.0
  %130 = vmatpush1.msra.mxu0 0.0
  %131 = vmatprep.subr.mxu0 0.0
  %132 = vmatpush1.msra.mxu0 0.0
  %133 = vmatprep.subr.mxu0 0.0
  %134 = vmatpush1.msra.mxu0 0.0
  %135 = vmatprep.subr.mxu0 0.0
  %136 = vmatpush1.msra.mxu0 0.0
  %137 = vmatprep.subr.mxu0 0.0
  %138 = vmatpush1.msra.mxu0 0.0
  %139 = vmatprep.subr.mxu0 0.0
  %140 = vmatpush1.msra.mxu0 0.0
  %141 = vmatprep.subr.mxu0 0.0
  %142 = vmatpush1.msra.mxu0 0.0
  %143 = vmatprep.subr.mxu0 0.0
  %144 = vmatpush1.msra.mxu0 0.0
  %145 = vmatprep.subr.mxu0 0.0
  %146 = vmatpush1.msra.mxu0 0.0
  %147 = vmatprep.subr.mxu0 0.0
  %148 = vmatpush1.msra.mxu0 0.0
  %149 = vmatprep.subr.mxu0 0.0
  %150 = vmatpush1.msra.mxu0 0.0
  %151 = vmatprep.subr.mxu0 0.0
  %152 = vmatpush1.msra.mxu0 0.0
  %153 = vmatprep.subr.mxu0 0.0
  %154 = vmatpush1.msra.mxu0 0.0
  %155 = vmatprep.subr.mxu0 0.0
  %156 = vmatpush1.msra.mxu0 0.0
  %157 = vmatprep.subr.mxu0 0.0
  %158 = vmatpush1.msra.mxu0 0.0
  %159 = vmatprep.subr.mxu0 0.0
  %160 = vmatpush1.msra.mxu0 0.0
  %161 = vmatprep.subr.mxu0 0.0
  %162 = vmatpush1.msra.mxu0 0.0
  %163 = vmatprep.subr.mxu0 0.0
  %164 = vmatpush1.msra.mxu0 0.0
  %165 = vmatprep.subr.mxu0 0.0
  %166 = vmatpush1.msra.mxu0 0.0
  %167 = vmatprep.subr.mxu0 0.0
  %168 = vmatpush1.msra.mxu0 0.0
  %169 = vmatprep.subr.mxu0 0.0
  %170 = vmatpush1.msra.mxu0 0.0
  %171 = vmatprep.mubr.f32.mxu0 0.0
  %172 = vmatmul.mubr.f32.gmra.mrb[0].mxu0 %v102
  %v173 = vpop.f32.mrb[0].mxu0
  %v174 = vadd.f32 %v97, %v173
  %v175 = vpop.f32.mrb[0].mxu0
  %176 = vdwg.mxu0
  %v177 = vld [vmem:[%s2 + $0x18] sm:$0x1]
  %v178 = vlaneseq
  %v179 = vshrl.u32 %v178, 7
  %v180 = vsub.s32 0, %v179
  %v181 = vrot.slane %v177, %v180
  %v182 = vadd.f32 %v174, %v181
  %vm183 = vcmp.ge.f32.partialorder %v182, 0.0
  %v184 = vmul.f32 %v182, 0.01
  %v185 = vsel %vm183, %v182, %v184
  %v186 = vld [vmem:[%s2 + $0x30] sm:$0xff]
  %v187 = vld [vmem:[%s2 + $0x38] sm:$0xff]
  %v188 = vld [vmem:[%s2 + $0x40] sm:$0xff]
  %v189 = vld [vmem:[%s2 + $0x48] sm:$0xff]
  %v190 = vld [vmem:[%s2 + $0x50] sm:$0xff]
  %v191 = vld [vmem:[%s2 + $0x58] sm:$0xff]
  %v192 = vld [vmem:[%s2 + $0x60] sm:$0xff]
  %v193 = vld [vmem:[%s2 + $0x68] sm:$0xff]
  %v194 = vld [vmem:[%s2 + $0x20] sm:$0x1]
  %v195 = vlaneseq
  %v196 = vshrl.u32 %v195, 7
  %v197 = vsub.s32 0, %v196
  %v198 = vrot.slane %v194, %v197
  %vm199 = vcmask 523264
  %v201 = vsel %vm199, %v185, 0
  %203 = vmatprep.subr.mxu0 0.0
  %204 = vmatpush1.msra.mxu0 %v186
  %205 = vmatprep.subr.mxu0 0.0
  %206 = vmatpush1.msra.mxu0 %v187
  %207 = vmatprep.subr.mxu0 0.0
  %208 = vmatpush1.msra.mxu0 %v188
  %209 = vmatprep.subr.mxu0 0.0
  %210 = vmatpush1.msra.mxu0 %v189
  %211 = vmatprep.subr.mxu0 0.0
  %212 = vmatpush1.msra.mxu0 %v190
  %213 = vmatprep.subr.mxu0 0.0
  %214 = vmatpush1.msra.mxu0 %v191
  %215 = vmatprep.subr.mxu0 0.0
  %216 = vmatpush1.msra.mxu0 %v192
  %217 = vmatprep.subr.mxu0 0.0
  %218 = vmatpush1.msra.mxu0 %v193
  %219 = vmatprep.subr.mxu0 0.0
  %220 = vmatpush1.msra.mxu0 0.0
  %221 = vmatprep.subr.mxu0 0.0
  %222 = vmatpush1.msra.mxu0 0.0
  %223 = vmatprep.subr.mxu0 0.0
  %224 = vmatpush1.msra.mxu0 0.0
  %225 = vmatprep.subr.mxu0 0.0
  %226 = vmatpush1.msra.mxu0 0.0
  %227 = vmatprep.subr.mxu0 0.0
  %228 = vmatpush1.msra.mxu0 0.0
  %229 = vmatprep.subr.mxu0 0.0
  %230 = vmatpush1.msra.mxu0 0.0
  %231 = vmatprep.subr.mxu0 0.0
  %232 = vmatpush1.msra.mxu0 0.0
  %233 = vmatprep.subr.mxu0 0.0
  %234 = vmatpush1.msra.mxu0 0.0
  %235 = vmatprep.subr.mxu0 0.0
  %236 = vmatpush1.msra.mxu0 0.0
  %237 = vmatprep.subr.mxu0 0.0
  %238 = vmatpush1.msra.mxu0 0.0
  %239 = vmatprep.subr.mxu0 0.0
  %240 = vmatpush1.msra.mxu0 0.0
  %241 = vmatprep.subr.mxu0 0.0
  %242 = vmatpush1.msra.mxu0 0.0
  %243 = vmatprep.subr.mxu0 0.0
  %244 = vmatpush1.msra.mxu0 0.0
  %245 = vmatprep.subr.mxu0 0.0
  %246 = vmatpush1.msra.mxu0 0.0
  %247 = vmatprep.subr.mxu0 0.0
  %248 = vmatpush1.msra.mxu0 0.0
  %249 = vmatprep.subr.mxu0 0.0
  %250 = vmatpush1.msra.mxu0 0.0
  %251 = vmatprep.subr.mxu0 0.0
  %252 = vmatpush1.msra.mxu0 0.0
  %253 = vmatprep.subr.mxu0 0.0
  %254 = vmatpush1.msra.mxu0 0.0
  %255 = vmatprep.subr.mxu0 0.0
  %256 = vmatpush1.msra.mxu0 0.0
  %257 = vmatprep.subr.mxu0 0.0
  %258 = vmatpush1.msra.mxu0 0.0
  %259 = vmatprep.subr.mxu0 0.0
  %260 = vmatpush1.msra.mxu0 0.0
  %261 = vmatprep.subr.mxu0 0.0
  %262 = vmatpush1.msra.mxu0 0.0
  %263 = vmatprep.subr.mxu0 0.0
  %264 = vmatpush1.msra.mxu0 0.0
  %265 = vmatprep.subr.mxu0 0.0
  %266 = vmatpush1.msra.mxu0 0.0
  %267 = vmatprep.mubr.f32.mxu0 0.0
  %268 = vmatmul.mubr.f32.gmra.mrb[0].mxu0 %v201
  %v269 = vpop.f32.mrb[0].mxu0
  %v270 = vadd.f32 %v198, %v269
  %v271 = vpop.f32.mrb[0].mxu0
  %272 = vdwg.mxu0
  %vm273 = vcmp.ge.f32.partialorder %v270, 0.0
  %v274 = vmul.f32 %v270, 0.01
  %v275 = vsel %vm273, %v270, %v274
  %v276 = vld [vmem:[%s3] sm:$0xff]
  %v277 = vld [vmem:[%s3 + $0x8] sm:$0xff]
  %v278 = vld [vmem:[%s3 + $0x10] sm:$0xff]
  %v279 = vld [vmem:[%s3 + $0x18] sm:$0xff]
  %v280 = vld [vmem:[%s3 + $0x20] sm:$0xff]
  %v281 = vld [vmem:[%s3 + $0x28] sm:$0xff]
  %v282 = vld [vmem:[%s3 + $0x30] sm:$0xff]
  %v283 = vld [vmem:[%s3 + $0x38] sm:$0xff]
  %v284 = vld [vmem:[%s2 + $0x28] sm:$0x1]
  %v285 = vlaneseq
  %v286 = vshrl.u32 %v285, 7
  %v287 = vsub.s32 0, %v286
  %v288 = vrot.slane %v284, %v287
  %v290 = vsel %vm199, %v275, 0
  %292 = vmatprep.subr.mxu0 0.0
  %293 = vmatpush1.msra.mxu0 %v276
  %294 = vmatprep.subr.mxu0 0.0
  %295 = vmatpush1.msra.mxu0 %v277
  %296 = vmatprep.subr.mxu0 0.0
  %297 = vmatpush1.msra.mxu0 %v278
  %298 = vmatprep.subr.mxu0 0.0
  %299 = vmatpush1.msra.mxu0 %v279
  %300 = vmatprep.subr.mxu0 0.0
  %301 = vmatpush1.msra.mxu0 %v280
  %302 = vmatprep.subr.mxu0 0.0
  %303 = vmatpush1.msra.mxu0 %v281
  %304 = vmatprep.subr.mxu0 0.0
  %305 = vmatpush1.msra.mxu0 %v282
  %306 = vmatprep.subr.mxu0 0.0
  %307 = vmatpush1.msra.mxu0 %v283
  %308 = vmatprep.subr.mxu0 0.0
  %309 = vmatpush1.msra.mxu0 0.0
  %310 = vmatprep.subr.mxu0 0.0
  %311 = vmatpush1.msra.mxu0 0.0
  %312 = vmatprep.subr.mxu0 0.0
  %313 = vmatpush1.msra.mxu0 0.0
  %314 = vmatprep.subr.mxu0 0.0
  %315 = vmatpush1.msra.mxu0 0.0
  %316 = vmatprep.subr.mxu0 0.0
  %317 = vmatpush1.msra.mxu0 0.0
  %318 = vmatprep.subr.mxu0 0.0
  %319 = vmatpush1.msra.mxu0 0.0
  %320 = vmatprep.subr.mxu0 0.0
  %321 = vmatpush1.msra.mxu0 0.0
  %322 = vmatprep.subr.mxu0 0.0
  %323 = vmatpush1.msra.mxu0 0.0
  %324 = vmatprep.subr.mxu0 0.0
  %325 = vmatpush1.msra.mxu0 0.0
  %326 = vmatprep.subr.mxu0 0.0
  %327 = vmatpush1.msra.mxu0 0.0
  %328 = vmatprep.subr.mxu0 0.0
  %329 = vmatpush1.msra.mxu0 0.0
  %330 = vmatprep.subr.mxu0 0.0
  %331 = vmatpush1.msra.mxu0 0.0
  %332 = vmatprep.subr.mxu0 0.0
  %333 = vmatpush1.msra.mxu0 0.0
  %334 = vmatprep.subr.mxu0 0.0
  %335 = vmatpush1.msra.mxu0 0.0
  %336 = vmatprep.subr.mxu0 0.0
  %337 = vmatpush1.msra.mxu0 0.0
  %338 = vmatprep.subr.mxu0 0.0
  %339 = vmatpush1.msra.mxu0 0.0
  %340 = vmatprep.subr.mxu0 0.0
  %341 = vmatpush1.msra.mxu0 0.0
  %342 = vmatprep.subr.mxu0 0.0
  %343 = vmatpush1.msra.mxu0 0.0
  %344 = vmatprep.subr.mxu0 0.0
  %345 = vmatpush1.msra.mxu0 0.0
  %346 = vmatprep.subr.mxu0 0.0
  %347 = vmatpush1.msra.mxu0 0.0
  %348 = vmatprep.subr.mxu0 0.0
  %349 = vmatpush1.msra.mxu0 0.0
  %350 = vmatprep.subr.mxu0 0.0
  %351 = vmatpush1.msra.mxu0 0.0
  %352 = vmatprep.subr.mxu0 0.0
  %353 = vmatpush1.msra.mxu0 0.0
  %354 = vmatprep.subr.mxu0 0.0
  %355 = vmatpush1.msra.mxu0 0.0
  %356 = vmatprep.mubr.f32.mxu0 0.0
  %357 = vmatmul.mubr.f32.gmra.mrb[0].mxu0 %v290
  %v358 = vpop.f32.mrb[0].mxu0
  %v359 = vadd.f32 %v288, %v358
  %v360 = vpop.f32.mrb[0].mxu0
  %361 = vdwg.mxu0
  %vm362 = vcmask 15360
  %363 = vst.msk [vmem:[%s4] sm:$0xff] %vm362, %v359
  // Predicated region
  $region18: #{fwd.1} parent=0 // pred_check
    _
  $region19: #{fwd.1} parent=0 // pred_check_branch
    %365 = sbr.rel (0) target = $region21
  $region20: #{fwd.1} parent=0 // pred_region
    _
  $region21: #{fwd.1} parent=0 // pred_fallthru
    _
  // Predicated region
  $region22: #{fwd.1} parent=0 // pred_check
    _
  $region23: #{fwd.1} parent=0 // pred_check_branch
    %367 = sbr.rel (0) target = $region25
  $region24: #{fwd.1} parent=0 // pred_region
    _
  $region25: #{fwd.1} parent=0 // pred_fallthru
    _

</llo_original>
